<compile_context>
chip_gen: v7x
topology: tpu7x:2x2x1
jax: 0.10.0
libtpu: 0.0.40
codegen_flags: <defaults>
</compile_context>

<pallas_src>
import functools
import math

import jax
import jax.numpy as jnp
from jax.experimental import pallas as pl
from jax.experimental.pallas import tpu as pltpu

# --- small config consistent with VishwamaiConfig ratios -------------------
HIDDEN = 32          # hidden_size
N_HEADS = 4          # num_attention_heads
N_KV = 2             # num_key_value_heads
HEAD_DIM = HIDDEN // N_HEADS   # 8
BATCH = 2
SEQ = 8

COMPUTE_DTYPE = jnp.bfloat16   # MXU input dtype; accumulation / softmax stay f32


def _attention_kernel(x_ref, mask_ref, wqkv_ref, wo_ref, o_ref, *,
                      n_heads, n_kv, head_dim):
    """One grid step == one batch element.

    x_ref    : (S, H)             bf16 activations
    mask_ref : (S, S)             f32 additive mask for this batch
    wqkv_ref : (H, nH*d + 2*n_kv*d) bf16 packed Q|K|V weights (no GQA replication)
    wo_ref   : (nH*d, H)          bf16 output projection
    o_ref    : (S, H)             f32 output
    """
    S, H = x_ref.shape
    group = n_heads // n_kv
    dq = n_heads * head_dim
    dkv = n_kv * head_dim

    x = x_ref[...]            # (S, H)
    mask = mask_ref[...]      # (S, S) f32
    wqkv = wqkv_ref[...]      # (H, dq + 2*dkv)
    wo = wo_ref[...]          # (dq, H)

    # --- fused QKV projection: ONE MXU matmul, f32 accumulation ------------
    qkv = jnp.dot(x, wqkv, preferred_element_type=jnp.float32)   # (S, dq+2*dkv)

    q = qkv[:, :dq].astype(x.dtype)                              # (S, dq)
    k = qkv[:, dq:dq + dkv].astype(x.dtype)                      # (S, dkv)
    v = qkv[:, dq + dkv:].astype(x.dtype)                        # (S, dkv)

    # heads -> leading (batch) axis for the 3-D contractions
    qh = q.reshape(S, n_heads, head_dim).transpose(1, 0, 2)      # (nH,  S, d)
    kh = k.reshape(S, n_kv, head_dim).transpose(1, 0, 2)         # (nKV, S, d)
    vh = v.reshape(S, n_kv, head_dim).transpose(1, 0, 2)         # (nKV, S, d)

    # GQA: broadcast the (already projected) K/V activations across the group.
    # Only n_kv heads were projected -> no wasted projection FLOPs/weights.
    kh = jnp.broadcast_to(kh[:, None], (n_kv, group, S, head_dim)
                          ).reshape(n_heads, S, head_dim)
    vh = jnp.broadcast_to(vh[:, None], (n_kv, group, S, head_dim)
                          ).reshape(n_heads, S, head_dim)

    # --- scores + numerically-stable f32 softmax ---------------------------
    scale = 1.0 / math.sqrt(head_dim)
    s = jnp.einsum('hqd,hkd->hqk', qh, kh,
                   preferred_element_type=jnp.float32)           # (nH, S, S)
    s = s * scale + mask[None]
    m = jnp.max(s, axis=-1, keepdims=True)
    p = jnp.exp(s - m)
    denom = jnp.sum(p, axis=-1, keepdims=True)
    p = p * pl.reciprocal(denom, approx=True)                    # EUP, not VPU divide

    ctx = jnp.einsum('hqk,hkd->hqd', p.astype(x.dtype), vh,
                     preferred_element_type=jnp.float32)         # (nH, S, d)

    # --- output projection: ONE (S, nH*d) @ (nH*d, H) matmul ---------------
    ctx2 = ctx.transpose(1, 0, 2).reshape(S, dq).astype(x.dtype)
    out = jnp.dot(ctx2, wo, preferred_element_type=jnp.float32)  # (S, H)
    o_ref[...] = out.astype(o_ref.dtype)                         # single store


def vishwamai_attention(x, attention_mask, wq, wk, wv, wo, *,
                        num_heads=N_HEADS, num_kv_heads=N_KV,
                        compute_dtype=COMPUTE_DTYPE):
    """x: (B,S,H) f32; attention_mask: (B,S,S) additive f32 (or None);
    wq/wo: (H,H), wk/wv: (H, n_kv*head_dim) -- all [in, out] layout."""
    B, S, H = x.shape
    hd = H // num_heads
    dq = num_heads * hd
    dkv = num_kv_heads * hd

    # Pack Q|K|V weights (no GQA replication) and cast MXU inputs to bf16.
    wqkv = jnp.concatenate([wq, wk, wv], axis=1).astype(compute_dtype)  # (H, dq+2*dkv)
    wo_c = wo.astype(compute_dtype)                                     # (dq, H)
    x_c = x.astype(compute_dtype)

    if attention_mask is None:
        attention_mask = jnp.zeros((B, S, S), jnp.float32)
    mask = attention_mask.astype(jnp.float32)

    kernel = functools.partial(_attention_kernel, n_heads=num_heads,
                               n_kv=num_kv_heads, head_dim=hd)

    out = pl.pallas_call(
        kernel,
        out_shape=jax.ShapeDtypeStruct((B, S, H), jnp.float32),
        grid=(B,),                                   # batch = independent grid axis
        in_specs=[
            pl.BlockSpec((None, S, H), lambda b: (b, 0, 0)),      # x     (per batch)
            pl.BlockSpec((None, S, S), lambda b: (b, 0, 0)),      # mask  (per batch)
            pl.BlockSpec((H, dq + 2 * dkv), lambda b: (0, 0)),    # fused Wqkv (resident)
            pl.BlockSpec((dq, H), lambda b: (0, 0)),              # Wo        (resident)
        ],
        out_specs=pl.BlockSpec((None, S, H), lambda b: (b, 0, 0)),
        compiler_params=pltpu.CompilerParams(
            dimension_semantics=("parallel",)),      # shardable across v7x TCs
    )(x_c, mask, wqkv, wo_c)

    return out


def _reference(x, mask, wq, wk, wv, wo):
    """Pure-JAX f32 reference of the same GQA forward for a sanity check."""
    B, S, H = x.shape
    q = jnp.einsum('bsh,hd->bsd', x, wq).reshape(B, S, N_HEADS, HEAD_DIM)
    k = jnp.einsum('bsh,hd->bsd', x, wk).reshape(B, S, N_KV, HEAD_DIM)
    v = jnp.einsum('bsh,hd->bsd', x, wv).reshape(B, S, N_KV, HEAD_DIM)
    group = N_HEADS // N_KV
    k = jnp.repeat(k, group, axis=2)
    v = jnp.repeat(v, group, axis=2)
    s = jnp.einsum('bqhd,bkhd->bhqk', q, k) / math.sqrt(HEAD_DIM)
    s = s + mask[:, None, :, :]
    p = jax.nn.softmax(s, axis=-1)
    o = jnp.einsum('bhqk,bkhd->bqhd', p, v).reshape(B, S, H)
    return jnp.einsum('bsh,hd->bsd', o, wo)


if __name__ == "__main__":
    key = jax.random.PRNGKey(0)
    kx, kq, kk, kv, ko = jax.random.split(key, 5)

    x = jax.random.normal(kx, (BATCH, SEQ, HIDDEN), dtype=jnp.float32)

    # nn.Linear weights in PyTorch layout [out, in], deterministic init.
    std = 0.05
    wq_pt = std * jax.random.normal(kq, (HIDDEN, HIDDEN), dtype=jnp.float32)
    wk_pt = std * jax.random.normal(kk, (N_KV * HEAD_DIM, HIDDEN), dtype=jnp.float32)
    wv_pt = std * jax.random.normal(kv, (N_KV * HEAD_DIM, HIDDEN), dtype=jnp.float32)
    wo_pt = std * jax.random.normal(ko, (HIDDEN, HIDDEN), dtype=jnp.float32)

    # Transpose to [in, out] for the kernel (y = x @ W^T in PyTorch).
    wq, wk, wv, wo = wq_pt.T, wk_pt.T, wv_pt.T, wo_pt.T

    # Per-batch causal additive attention mask (B, S, S).
    causal = jnp.tril(jnp.ones((SEQ, SEQ), dtype=jnp.float32))
    mask = jnp.where(causal == 1.0, 0.0, -1e9)
    mask = jnp.broadcast_to(mask[None], (BATCH, SEQ, SEQ))

    out = vishwamai_attention(x, mask, wq, wk, wv, wo)
    out = jax.block_until_ready(out)

    ref = _reference(x, mask, wq, wk, wv, wo)
    assert out.shape == (BATCH, SEQ, HIDDEN)
    # tolerance accounts for bf16 MXU inputs + the approximate (EUP) reciprocal
    assert jnp.allclose(out, ref, atol=2e-2, rtol=2e-2), "mismatch vs JAX reference"

    print("KERNEL_OK")
</pallas_src>

<mosaic_0001>
module attributes {stable_mosaic.version = 11 : i64} {
  func.func @_attention_kernel(%arg0: i32, %arg1: memref<1x8x32xbf16, #tpu.memory_space<vmem>>, %arg2: memref<1x8x8xf32, #tpu.memory_space<vmem>>, %arg3: memref<32x64xbf16, #tpu.memory_space<vmem>>, %arg4: memref<32x32xbf16, #tpu.memory_space<vmem>>, %arg5: memref<1x8x32xf32, #tpu.memory_space<vmem>>) attributes {dimension_semantics = [#tpu.dimension_semantics<parallel>], iteration_bounds = array<i64: 2>, scalar_prefetch = 0 : i64, scratch_operands = 0 : i64, tpu.core_type = #tpu.core_type<tc>, window_params = [{transform_indices = @transform_0, window_bounds = array<i64: 1, 8, 32>}, {transform_indices = @transform_1, window_bounds = array<i64: 1, 8, 8>}, {pipeline_mode = #tpu.pipeline_mode<synchronous>, transform_indices = @transform_2, window_bounds = array<i64: 32, 64>}, {pipeline_mode = #tpu.pipeline_mode<synchronous>, transform_indices = @transform_3, window_bounds = array<i64: 32, 32>}, {transform_indices = @transform_4, window_bounds = array<i64: 1, 8, 32>}]} {
    %c0 = arith.constant 0 : index
    %c0_0 = arith.constant 0 : index
    %c0_1 = arith.constant 0 : index
    %0 = vector.load %arg1[%c0, %c0_0, %c0_1] : memref<1x8x32xbf16, #tpu.memory_space<vmem>>, vector<1x8x32xbf16>
    %1 = vector.shape_cast %0 : vector<1x8x32xbf16> to vector<8x32xbf16>
    %c0_2 = arith.constant 0 : index
    %c0_3 = arith.constant 0 : index
    %c0_4 = arith.constant 0 : index
    %2 = vector.load %arg2[%c0_2, %c0_3, %c0_4] : memref<1x8x8xf32, #tpu.memory_space<vmem>>, vector<1x8x8xf32>
    %3 = vector.shape_cast %2 : vector<1x8x8xf32> to vector<8x8xf32>
    %c0_5 = arith.constant 0 : index
    %c0_6 = arith.constant 0 : index
    %4 = vector.load %arg3[%c0_5, %c0_6] : memref<32x64xbf16, #tpu.memory_space<vmem>>, vector<32x64xbf16>
    %c0_7 = arith.constant 0 : index
    %c0_8 = arith.constant 0 : index
    %5 = vector.load %arg4[%c0_7, %c0_8] : memref<32x32xbf16, #tpu.memory_space<vmem>>, vector<32x32xbf16>
    %cst = arith.constant dense<0.000000e+00> : vector<8x64xf32>
    %6 = tpu.matmul %1, %4, %cst {dimension_numbers = #tpu.dot_dimension_numbers<[1], [0], [0], [1], [0, 0, 1, 1], [], []>} : vector<8x32xbf16>, vector<32x64xbf16>, vector<8x64xf32> -> vector<8x64xf32>
    %7 = vector.extract_strided_slice %6 {offsets = [0, 0], sizes = [8, 32], strides = [1, 1]} : vector<8x64xf32> to vector<8x32xf32>
    %8 = arith.truncf %7 : vector<8x32xf32> to vector<8x32xbf16>
    %9 = vector.extract_strided_slice %6 {offsets = [0, 32], sizes = [8, 16], strides = [1, 1]} : vector<8x64xf32> to vector<8x16xf32>
    %10 = arith.truncf %9 : vector<8x16xf32> to vector<8x16xbf16>
    %11 = vector.extract_strided_slice %6 {offsets = [0, 48], sizes = [8, 16], strides = [1, 1]} : vector<8x64xf32> to vector<8x16xf32>
    %12 = arith.truncf %11 : vector<8x16xf32> to vector<8x16xbf16>
    %13 = vector.shape_cast %8 : vector<8x32xbf16> to vector<8x4x8xbf16>
    %14 = tpu.transpose %13, [1, 0, 2] : vector<8x4x8xbf16> -> vector<4x8x8xbf16>
    %15 = vector.shape_cast %10 : vector<8x16xbf16> to vector<8x2x8xbf16>
    %16 = tpu.transpose %15, [1, 0, 2] : vector<8x2x8xbf16> -> vector<2x8x8xbf16>
    %17 = vector.shape_cast %12 : vector<8x16xbf16> to vector<8x2x8xbf16>
    %18 = tpu.transpose %17, [1, 0, 2] : vector<8x2x8xbf16> -> vector<2x8x8xbf16>
    %19 = vector.shape_cast %16 : vector<2x8x8xbf16> to vector<2x1x8x8xbf16>
    %20 = vector.shape_cast %19 : vector<2x1x8x8xbf16> to vector<2x1x8x8xbf16>
    %21 = vector.broadcast %20 : vector<2x1x8x8xbf16> to vector<2x2x8x8xbf16>
    %22 = vector.shape_cast %21 : vector<2x2x8x8xbf16> to vector<4x8x8xbf16>
    %23 = vector.shape_cast %18 : vector<2x8x8xbf16> to vector<2x1x8x8xbf16>
    %24 = vector.shape_cast %23 : vector<2x1x8x8xbf16> to vector<2x1x8x8xbf16>
    %25 = vector.broadcast %24 : vector<2x1x8x8xbf16> to vector<2x2x8x8xbf16>
    %26 = vector.shape_cast %25 : vector<2x2x8x8xbf16> to vector<4x8x8xbf16>
    "tpu.trace_start"() <{level = 10 : i32, message = "hqd,hkd->hqk"}> : () -> ()
    %cst_9 = arith.constant dense<0.000000e+00> : vector<4x8x8xf32>
    %27 = tpu.matmul %14, %22, %cst_9 {dimension_numbers = #tpu.dot_dimension_numbers<[2], [2], [1], [1], [0, 0, 0, 1, 1, 1], [0], [0]>} : vector<4x8x8xbf16>, vector<4x8x8xbf16>, vector<4x8x8xf32> -> vector<4x8x8xf32>
    "tpu.trace_stop"() : () -> ()
    %cst_10 = arith.constant 0.353553385 : f32
    %28 = vector.broadcast %cst_10 : f32 to vector<4x8x8xf32>
    %29 = arith.mulf %27, %28 : vector<4x8x8xf32>
    %30 = vector.shape_cast %3 : vector<8x8xf32> to vector<1x8x8xf32>
    %31 = vector.broadcast %30 : vector<1x8x8xf32> to vector<4x8x8xf32>
    %32 = arith.addf %29, %31 : vector<4x8x8xf32>
    %cst_11 = arith.constant dense<0xFF800000> : vector<4x8xf32>
    %33 = vector.multi_reduction <maximumf>, %32, %cst_11 [2] : vector<4x8x8xf32> to vector<4x8xf32>
    %34 = vector.shape_cast %33 : vector<4x8xf32> to vector<4x8x1xf32>
    %35 = vector.broadcast %34 : vector<4x8x1xf32> to vector<4x8x8xf32>
    %36 = arith.subf %32, %35 : vector<4x8x8xf32>
    %37 = math.exp %36 : vector<4x8x8xf32>
    %cst_12 = arith.constant dense<0.000000e+00> : vector<4x8xf32>
    %38 = vector.multi_reduction <add>, %37, %cst_12 [2] : vector<4x8x8xf32> to vector<4x8xf32>
    %39 = vector.shape_cast %38 : vector<4x8xf32> to vector<4x8x1xf32>
    %40 = tpu.reciprocal %39 {approx = true} : vector<4x8x1xf32> -> vector<4x8x1xf32>
    %41 = vector.broadcast %40 : vector<4x8x1xf32> to vector<4x8x8xf32>
    %42 = arith.mulf %37, %41 : vector<4x8x8xf32>
    %43 = arith.truncf %42 : vector<4x8x8xf32> to vector<4x8x8xbf16>
    "tpu.trace_start"() <{level = 10 : i32, message = "hqk,hkd->hqd"}> : () -> ()
    %cst_13 = arith.constant dense<0.000000e+00> : vector<4x8x8xf32>
    %44 = tpu.matmul %43, %26, %cst_13 {dimension_numbers = #tpu.dot_dimension_numbers<[2], [1], [1], [2], [0, 0, 0, 1, 1, 2], [0], [0]>} : vector<4x8x8xbf16>, vector<4x8x8xbf16>, vector<4x8x8xf32> -> vector<4x8x8xf32>
    "tpu.trace_stop"() : () -> ()
    %45 = tpu.transpose %44, [1, 0, 2] : vector<4x8x8xf32> -> vector<8x4x8xf32>
    %46 = vector.shape_cast %45 : vector<8x4x8xf32> to vector<8x32xf32>
    %47 = arith.truncf %46 : vector<8x32xf32> to vector<8x32xbf16>
    %cst_14 = arith.constant dense<0.000000e+00> : vector<8x32xf32>
    %48 = tpu.matmul %47, %5, %cst_14 {dimension_numbers = #tpu.dot_dimension_numbers<[1], [0], [0], [1], [0, 0, 1, 1], [], []>} : vector<8x32xbf16>, vector<32x32xbf16>, vector<8x32xf32> -> vector<8x32xf32>
    %c0_15 = arith.constant 0 : index
    %c0_16 = arith.constant 0 : index
    %c0_17 = arith.constant 0 : index
    %49 = vector.load %arg5[%c0_15, %c0_16, %c0_17] : memref<1x8x32xf32, #tpu.memory_space<vmem>>, vector<1x8x32xf32>
    %50 = vector.shape_cast %49 : vector<1x8x32xf32> to vector<8x32xf32>
    %51 = vector.shape_cast %48 : vector<8x32xf32> to vector<1x8x32xf32>
    tpu.vector_store %arg5[%c0_15, %c0_16, %c0_17], %51 {strides = array<i32>} : memref<1x8x32xf32, #tpu.memory_space<vmem>>, vector<1x8x32xf32>,
    return
  }
  func.func @transform_0(%arg0: i32) -> (i32, i32, i32) {
    %c0_i32 = arith.constant 0 : i32
    %c0_i32_0 = arith.constant 0 : i32
    %c0_i32_1 = arith.constant 0 : i32
    return %arg0, %c0_i32, %c0_i32_0 : i32, i32, i32
  }
  func.func @transform_1(%arg0: i32) -> (i32, i32, i32) {
    %c0_i32 = arith.constant 0 : i32
    %c0_i32_0 = arith.constant 0 : i32
    %c0_i32_1 = arith.constant 0 : i32
    return %arg0, %c0_i32, %c0_i32_0 : i32, i32, i32
  }
  func.func @transform_2(%arg0: i32) -> (i32, i32) {
    %c0_i32 = arith.constant 0 : i32
    %c0_i32_0 = arith.constant 0 : i32
    %c0_i32_1 = arith.constant 0 : i32
    return %c0_i32, %c0_i32_0 : i32, i32
  }
  func.func @transform_3(%arg0: i32) -> (i32, i32) {
    %c0_i32 = arith.constant 0 : i32
    %c0_i32_0 = arith.constant 0 : i32
    %c0_i32_1 = arith.constant 0 : i32
    return %c0_i32, %c0_i32_0 : i32, i32
  }
  func.func @transform_4(%arg0: i32) -> (i32, i32, i32) {
    %c0_i32 = arith.constant 0 : i32
    %c0_i32_0 = arith.constant 0 : i32
    %c0_i32_1 = arith.constant 0 : i32
    return %arg0, %c0_i32, %c0_i32_0 : i32, i32, i32
  }
}

</mosaic_0001>

<llo_original>
// kernel: tpu_custom_call.1
$region0: #{tpu_custom_call.1}
  #allocation0 [shape = 'u32[]', space=smem, size = 0x4, offset = 0x4, fixed_abs, tag = 'smem constant byte address 0x4 - core index']
  #allocation1 [shape = 'u32[144,128]{1,0:T(1,128)}', space=vmem, size = 0x12000, scoped, tag = 'internal scratch']
  %s0 = inlined_call_operand.hbm [shape: bf16[2,8,32], index: 0, kind: input, shape index: {}]
  %s1 = inlined_call_operand.hbm [shape: f32[2,8,8], index: 1, kind: input, shape index: {}]
  %s2 = inlined_call_operand.hbm [shape: bf16[32,64], index: 2, kind: input, shape index: {}]
  %s3 = inlined_call_operand.hbm [shape: bf16[32,32], index: 3, kind: input, shape index: {}]
  %s4 = inlined_call_operand.hbm [shape: f32[2,8,32], index: 4, kind: output, shape index: {}]
  %s5 = sld [smem:[#allocation0]]
  $region65: #{tpu_custom_call.1} parent=0
    _
  %s7 = ssub.s32 1, %s5
  %s8 = scalar_select 0, %s7, %s5
  $region1: #{tpu_custom_call.1} parent=0
    #allocation2 [shape = 'u8[4096]{0}', space=vmem, size = 0x1000, scoped, tag = 'input window, operand 0']
    #allocation3 [shape = 's32[2]{0}', space=sflag, size = 0x8, scoped, tag = 'scoped memory for tpu_custom_call.1']
    #allocation4 [shape = 's32[2]{0}', space=sflag, size = 0x8, scoped, tag = 'scoped memory for tpu_custom_call.1']
    #allocation5 [shape = 'u8[8192]{0}', space=vmem, size = 0x2000, scoped, tag = 'input window, operand 1']
    #allocation6 [shape = 's32[2]{0}', space=sflag, size = 0x8, scoped, tag = 'scoped memory for tpu_custom_call.1']
    #allocation7 [shape = 'u8[8192]{0}', space=vmem, size = 0x2000, scoped, tag = 'input window, operand 2, single buffered']
    #allocation8 [shape = 'u8[8192]{0}', space=vmem, size = 0x2000, scoped, tag = 'input window, operand 3, single buffered']
    #allocation9 [shape = 's32[1]{0}', space=sflag, size = 0x4, scoped, tag = 'scoped memory for tpu_custom_call.1']
    #allocation10 [shape = 'u8[8192]{0}', space=vmem, size = 0x2000, scoped, tag = 'output window, operand 0']
    %9 = vsyncpa [#allocation3], 0
    %s10 = scalar_lea.sflag [#allocation3], 1
    %11 = vsyncpa %s10, 0
    %12 = vsyncpa [#allocation6], 0
    %s13 = scalar_lea.sflag [#allocation6], 1
    %14 = vsyncpa %s13, 0
    %15 = vsyncpa [#allocation9], 0
    %16 = vsyncpa [#allocation4], 0
    %s17 = scalar_lea.sflag [#allocation4], 1
    %18 = vsyncpa %s17, 0
    loop: start=0, step=1, limit=4
    $region2: #{tpu_custom_call.1} parent=1 // loop_pre_header
      _
    $region3: #{tpu_custom_call.1} parent=1 // loop_header
      %s20 = sphi 0, %s24
      %p21 = scmp.ge.s32.totalorder %s20, 4
      %s30 = sphi 0, %s32
      %s33 = sphi 0, %s30
      %s34 = sphi 0, %s33
      %s50 = sphi 0, %s34
      %s56 = sphi 0, %s58
      %s59 = sphi 0, %s56
      %s60 = sphi 0, %s59
      %s76 = sphi 0, %s60
      %s80 = sphi 0, %s80
      %s82 = sphi 0, %s80
      %s83 = sphi 0, %s82
      %s97 = sphi 0, %s83
      %s101 = sphi 0, %s101
      %s103 = sphi 0, %s101
      %s104 = sphi 0, %s103
      %s118 = sphi 0, %s104
      %s124 = sphi 0, %s126
      %s127 = sphi 0, %s124
      %s128 = sphi 0, %s127
      %s144 = sphi 0, %s128
    $region4: #{tpu_custom_call.1} parent=1 // loop_header_branch
      %23 = sbr.rel (%p21) target = $region8
    $region5: #{tpu_custom_call.1} parent=1 // loop_body
      %s25 = ssub.s32 %s20, 1
      %s26 = ssub.s32 %s20, 2
      %s27 = sadd.s32 %s20, 1
      %s28 = ssub.s32 %s20, %s27
      %p29 = scmp.eq.s32.totalorder %s28, 0
      %s31 = sadd.s32 %s30, 1
      %s32 = scalar_select %p29, %s30, %s31
      %p35 = pneg %p29
      %p36 = scmp.eq.s32.totalorder %s20, 1
      %p37 = por %p35, %p36
      %p38 = scmp.ne.s32.totalorder %s30, %s33
      %p39 = scmp.eq.s32.totalorder %s20, 0
      %p40 = por %p38, %p39
      %p41 = scmp.ne.s32.totalorder %s30, %s33
      %p42 = scmp.eq.s32.totalorder %s25, 1
      %p43 = por %p41, %p42
      %p44 = scmp.ne.s32.totalorder %s33, %s34
      %p45 = scmp.eq.s32.totalorder %s25, 0
      %p46 = por %p44, %p45
      %p47 = scmp.ne.s32.totalorder %s33, %s34
      %p48 = scmp.eq.s32.totalorder %s26, 1
      %p49 = por %p47, %p48
      %p51 = scmp.ne.s32.totalorder %s34, %s50
      %p52 = scmp.eq.s32.totalorder %s26, 0
      %p53 = por %p51, %p52
      %s54 = ssub.s32 %s20, %s27
      %p55 = scmp.eq.s32.totalorder %s54, 0
      %s57 = sadd.s32 %s56, 1
      %s58 = scalar_select %p55, %s56, %s57
      %p61 = pneg %p55
      %p62 = scmp.eq.s32.totalorder %s20, 1
      %p63 = por %p61, %p62
      %p64 = scmp.ne.s32.totalorder %s56, %s59
      %p65 = scmp.eq.s32.totalorder %s20, 0
      %p66 = por %p64, %p65
      %p67 = scmp.ne.s32.totalorder %s56, %s59
      %p68 = scmp.eq.s32.totalorder %s25, 1
      %p69 = por %p67, %p68
      %p70 = scmp.ne.s32.totalorder %s59, %s60
      %p71 = scmp.eq.s32.totalorder %s25, 0
      %p72 = por %p70, %p71
      %p73 = scmp.ne.s32.totalorder %s59, %s60
      %p74 = scmp.eq.s32.totalorder %s26, 1
      %p75 = por %p73, %p74
      %p77 = scmp.ne.s32.totalorder %s60, %s76
      %p78 = scmp.eq.s32.totalorder %s26, 0
      %p79 = por %p77, %p78
      %s81 = sadd.s32 %s80, 1
      %p84 = scmp.eq.s32.totalorder %s20, 1
      %p85 = scmp.ne.s32.totalorder %s80, %s82
      %p86 = scmp.eq.s32.totalorder %s20, 0
      %p87 = por %p85, %p86
      %p88 = scmp.ne.s32.totalorder %s80, %s82
      %p89 = scmp.eq.s32.totalorder %s25, 1
      %p90 = por %p88, %p89
      %p91 = scmp.ne.s32.totalorder %s82, %s83
      %p92 = scmp.eq.s32.totalorder %s25, 0
      %p93 = por %p91, %p92
      %p94 = scmp.ne.s32.totalorder %s82, %s83
      %p95 = scmp.eq.s32.totalorder %s26, 1
      %p96 = por %p94, %p95
      %p98 = scmp.ne.s32.totalorder %s83, %s97
      %p99 = scmp.eq.s32.totalorder %s26, 0
      %p100 = por %p98, %p99
      %s102 = sadd.s32 %s101, 1
      %p105 = scmp.eq.s32.totalorder %s20, 1
      %p106 = scmp.ne.s32.totalorder %s101, %s103
      %p107 = scmp.eq.s32.totalorder %s20, 0
      %p108 = por %p106, %p107
      %p109 = scmp.ne.s32.totalorder %s101, %s103
      %p110 = scmp.eq.s32.totalorder %s25, 1
      %p111 = por %p109, %p110
      %p112 = scmp.ne.s32.totalorder %s103, %s104
      %p113 = scmp.eq.s32.totalorder %s25, 0
      %p114 = por %p112, %p113
      %p115 = scmp.ne.s32.totalorder %s103, %s104
      %p116 = scmp.eq.s32.totalorder %s26, 1
      %p117 = por %p115, %p116
      %p119 = scmp.ne.s32.totalorder %s104, %s118
      %p120 = scmp.eq.s32.totalorder %s26, 0
      %p121 = por %p119, %p120
      %s122 = ssub.s32 %s20, %s27
      %p123 = scmp.eq.s32.totalorder %s122, 0
      %s125 = sadd.s32 %s124, 1
      %s126 = scalar_select %p123, %s124, %s125
      %p129 = pneg %p123
      %p130 = scmp.eq.s32.totalorder %s20, 1
      %p131 = por %p129, %p130
      %p132 = scmp.ne.s32.totalorder %s124, %s127
      %p133 = scmp.eq.s32.totalorder %s20, 0
      %p134 = por %p132, %p133
      %p135 = scmp.ne.s32.totalorder %s124, %s127
      %p136 = scmp.eq.s32.totalorder %s25, 1
      %p137 = por %p135, %p136
      %p138 = scmp.ne.s32.totalorder %s127, %s128
      %p139 = scmp.eq.s32.totalorder %s25, 0
      %p140 = por %p138, %p139
      %p141 = scmp.ne.s32.totalorder %s127, %s128
      %p142 = scmp.eq.s32.totalorder %s26, 1
      %p143 = por %p141, %p142
      %p145 = scmp.ne.s32.totalorder %s128, %s144
      %p146 = scmp.eq.s32.totalorder %s26, 0
      %p147 = por %p145, %p146
      %p148 = scmp.le.s32.totalorder 1, %s20
      %p149 = scmp.lt.s32.totalorder %s20, 3
      %p150 = pnand %p148, %p149
      %p151 = pneg %p150
      // Predicated region
      $region9: #{tpu_custom_call.1} parent=5 // pred_check
        _
      $region10: #{tpu_custom_call.1} parent=5 // pred_check_branch
        %153 = sbr.rel (%p150) target = $region12
      $region11: #{tpu_custom_call.1} parent=5 // pred_region
        %s154 = ssub.s32 %s20, 1
        // Predicated region
        $region13: #{tpu_custom_call.1} parent=11 // pred_check
          %p155 = pneg %p93
        $region14: #{tpu_custom_call.1} parent=11 // pred_check_branch
          %157 = sbr.rel (%p155) target = $region16
        $region15: #{tpu_custom_call.1} parent=11 // pred_region
          %s159 = ssub.s32 256, 256
          %160 = vsyncadd [#allocation6], %s159
          %s161 = sshll.u32 [#allocation7], 4
          %s162 = int_to_ptr.vmem [resolvable:$true] %s161
          %167 = dma.hbm_to_vmem [thread:$0]  %s2, 256, %s162, [#allocation6], 64, 64, 4
        $region16: #{tpu_custom_call.1} parent=11 // pred_fallthru
          _
        // Predicated region
        $region17: #{tpu_custom_call.1} parent=11 // pred_check
          %p168 = pneg %p114
        $region18: #{tpu_custom_call.1} parent=11 // pred_check_branch
          %170 = sbr.rel (%p168) target = $region20
        $region19: #{tpu_custom_call.1} parent=11 // pred_region
          %s172 = ssub.s32 256, 256
          %173 = vsyncadd [#allocation9], %s172
          %s174 = sshll.u32 [#allocation8], 4
          %s175 = int_to_ptr.vmem [resolvable:$true] %s174
          %180 = dma.hbm_to_vmem [thread:$0]  %s3, 256, %s175, [#allocation9], 64, 64, 4
        $region20: #{tpu_custom_call.1} parent=11 // pred_fallthru
          _
      $region12: #{tpu_custom_call.1} parent=5 // pred_fallthru
        _
      %p181 = scmp.lt.s32.totalorder %s20, 2
      // Predicated region
      $region21: #{tpu_custom_call.1} parent=5 // pred_check
        %p182 = pneg %p181
      $region22: #{tpu_custom_call.1} parent=5 // pred_check_branch
        %184 = sbr.rel (%p182) target = $region24
      $region23: #{tpu_custom_call.1} parent=5 // pred_region
        // Predicated region
        $region25: #{tpu_custom_call.1} parent=23 // pred_check
          %p185 = pneg %p40
        $region26: #{tpu_custom_call.1} parent=23 // pred_check_branch
          %187 = sbr.rel (%p185) target = $region28
        $region27: #{tpu_custom_call.1} parent=23 // pred_region
          %s188 = sand.u32 %s30, 1
          %s189 = scalar_lea.sflag [#allocation3], %s188
          %s190 = sand.u32 %s30, 1
          %s191 = smul.addr %s190, 4
          %s192 = scalar_lea.vmem [#allocation2], %s191
          %s194 = ssub.s32 64, 64
          %195 = vsyncadd %s189, %s194
          %s196 = smul.addr %s20, 64
          %s197 = scalar_lea.hbm %s0, %s196
          %s199 = sshll.u32 %s192, 4
          %s200 = int_to_ptr.vmem [resolvable:$true] %s199
          %202 = dma.hbm_to_vmem [thread:$0]  %s197, 64, %s200, %s189
        $region28: #{tpu_custom_call.1} parent=23 // pred_fallthru
          _
        // Predicated region
        $region29: #{tpu_custom_call.1} parent=23 // pred_check
          %p203 = pneg %p66
        $region30: #{tpu_custom_call.1} parent=23 // pred_check_branch
          %205 = sbr.rel (%p203) target = $region32
        $region31: #{tpu_custom_call.1} parent=23 // pred_region
          %s206 = sand.u32 %s20, 1
          %s207 = scalar_lea.sflag [#allocation6], %s206
          %s208 = sand.u32 %s56, 1
          %s209 = smul.addr %s208, 8
          %s210 = scalar_lea.vmem [#allocation5], %s209
          %s212 = ssub.s32 128, 128
          %213 = vsyncadd %s207, %s212
          %s214 = smul.addr %s20, 128
          %s215 = scalar_lea.hbm %s1, %s214
          %s217 = sshll.u32 %s210, 4
          %s218 = int_to_ptr.vmem [resolvable:$true] %s217
          %220 = dma.hbm_to_vmem [thread:$0]  %s215, 128, %s218, %s207
        $region32: #{tpu_custom_call.1} parent=23 // pred_fallthru
          _
      $region24: #{tpu_custom_call.1} parent=5 // pred_fallthru
        _
      %p221 = scmp.le.s32.totalorder 1, %s20
      %p222 = scmp.lt.s32.totalorder %s20, 3
      %p223 = pnand %p221, %p222
      %p224 = pneg %p223
      // Predicated region
      $region33: #{tpu_custom_call.1} parent=5 // pred_check
        _
      $region34: #{tpu_custom_call.1} parent=5 // pred_check_branch
        %226 = sbr.rel (%p223) target = $region36
      $region35: #{tpu_custom_call.1} parent=5 // pred_region
        %s227 = ssub.s32 %s20, 1
        %s228 = sand.u32 %s33, 1
        %s229 = scalar_lea.sflag [#allocation3], %s228
        %s230 = sand.u32 %s33, 1
        %s231 = smul.addr %s230, 4
        %s232 = scalar_lea.vmem [#allocation2], %s231
        // Predicated region
        $region37: #{tpu_custom_call.1} parent=35 // pred_check
          %p233 = pneg %p46
        $region38: #{tpu_custom_call.1} parent=35 // pred_check_branch
          %235 = sbr.rel (%p233) target = $region40
        $region39: #{tpu_custom_call.1} parent=35 // pred_region
          %236 = dma.done %s229, 64
        $region40: #{tpu_custom_call.1} parent=35 // pred_fallthru
          _
        %s237 = sand.u32 %s25, 1
        %s238 = scalar_lea.sflag [#allocation6], %s237
        %s239 = sand.u32 %s59, 1
        %s240 = smul.addr %s239, 8
        %s241 = scalar_lea.vmem [#allocation5], %s240
        // Predicated region
        $region41: #{tpu_custom_call.1} parent=35 // pred_check
          %p242 = pneg %p72
        $region42: #{tpu_custom_call.1} parent=35 // pred_check_branch
          %244 = sbr.rel (%p242) target = $region44
        $region43: #{tpu_custom_call.1} parent=35 // pred_region
          %245 = dma.done %s238, 128
        $region44: #{tpu_custom_call.1} parent=35 // pred_fallthru
          _
        // Predicated region
        $region45: #{tpu_custom_call.1} parent=35 // pred_check
          %p246 = pneg %p93
        $region46: #{tpu_custom_call.1} parent=35 // pred_check_branch
          %248 = sbr.rel (%p246) target = $region48
        $region47: #{tpu_custom_call.1} parent=35 // pred_region
          %249 = dma.done [#allocation6], 256
        $region48: #{tpu_custom_call.1} parent=35 // pred_fallthru
          _
        // Predicated region
        $region49: #{tpu_custom_call.1} parent=35 // pred_check
          %p250 = pneg %p114
        $region50: #{tpu_custom_call.1} parent=35 // pred_check_branch
          %252 = sbr.rel (%p250) target = $region52
        $region51: #{tpu_custom_call.1} parent=35 // pred_region
          %253 = dma.done [#allocation9], 256
        $region52: #{tpu_custom_call.1} parent=35 // pred_fallthru
          _
        %s254 = sand.u32 %s33, 1
        %s255 = scalar_lea.sflag [#allocation3], %s254
        %s256 = sand.u32 %s33, 1
        %s257 = smul.addr %s256, 4
        %s258 = scalar_lea.vmem [#allocation2], %s257
        %p259 = pneg %p46
        %p260 = pneg %p43
        %s261 = sand.u32 %s25, 1
        %s262 = scalar_lea.sflag [#allocation6], %s261
        %s263 = sand.u32 %s59, 1
        %s264 = smul.addr %s263, 8
        %s265 = scalar_lea.vmem [#allocation5], %s264
        %p266 = pneg %p72
        %p267 = pneg %p69
        %p268 = pneg %p93
        %p269 = pneg %p90
        %p270 = pneg %p114
        %p271 = pneg %p111
        %p272 = pneg %p140
        %p273 = pneg %p137
        %s274 = sand.u32 %s127, 1
        %s275 = scalar_lea.sflag [#allocation4], %s274
        %s276 = sand.u32 %s127, 1
        %s277 = smul.addr %s276, 8
        %s278 = scalar_lea.vmem [#allocation10], %s277
        %v280 = vld [vmem:[%s232] sm:$0xf]
        %v281 = vld [vmem:[%s241] sm:$0xff]
        %v282 = vld [vmem:[#allocation7] sm:$0xf]
        %v283 = vld [vmem:[#allocation7 + $0x4] sm:$0xf]
        %v284 = vld [vmem:[#allocation7 + $0x8] sm:$0xf]
        %v285 = vld [vmem:[#allocation7 + $0xc] sm:$0xf]
        %v286 = vld [vmem:[#allocation8] sm:$0xf]
        %v287 = vld [vmem:[#allocation8 + $0x4] sm:$0xf]
        %v288 = vld [vmem:[#allocation8 + $0x8] sm:$0xf]
        %v289 = vld [vmem:[#allocation8 + $0xc] sm:$0xf]
        %v294 = vunpack.c.l.b16 %v282
        %v295 = vunpack.c.l.b16 %v283
        %v296 = vunpack.c.l.b16 %v284
        %v297 = vunpack.c.l.b16 %v285
        %v298 = vpack.c.b16 %v295, %v294
        %v299 = vpack.c.b16 %v297, %v296
        %vm302 = vcmask 261120
        %v304 = vsel %vm302, %v280, 0
        %306 = vmatprep.subr.bf16.mxu0 0
        %307 = vmatpush1.bf16.msra.mxu0 %v298
        %308 = vmatprep.subr.bf16.mxu0 0
        %309 = vmatpush1.bf16.msra.mxu0 %v299
        %310 = vmatprep.subr.bf16.mxu0 0
        %311 = vmatpush1.bf16.msra.mxu0 0
        %312 = vmatprep.subr.bf16.mxu0 0
        %313 = vmatpush1.bf16.msra.mxu0 0
        %314 = vmatprep.subr.bf16.mxu0 0
        %315 = vmatpush1.bf16.msra.mxu0 0
        %316 = vmatprep.subr.bf16.mxu0 0
        %317 = vmatpush1.bf16.msra.mxu0 0
        %318 = vmatprep.subr.bf16.mxu0 0
        %319 = vmatpush1.bf16.msra.mxu0 0
        %320 = vmatprep.subr.bf16.mxu0 0
        %321 = vmatpush1.bf16.msra.mxu0 0
        %322 = vmatprep.subr.bf16.mxu0 0
        %323 = vmatpush1.bf16.msra.mxu0 0
        %324 = vmatprep.subr.bf16.mxu0 0
        %325 = vmatpush1.bf16.msra.mxu0 0
        %326 = vmatprep.subr.bf16.mxu0 0
        %327 = vmatpush1.bf16.msra.mxu0 0
        %328 = vmatprep.subr.bf16.mxu0 0
        %329 = vmatpush1.bf16.msra.mxu0 0
        %330 = vmatprep.subr.bf16.mxu0 0
        %331 = vmatpush1.bf16.msra.mxu0 0
        %332 = vmatprep.subr.bf16.mxu0 0
        %333 = vmatpush1.bf16.msra.mxu0 0
        %334 = vmatprep.subr.bf16.mxu0 0
        %335 = vmatpush1.bf16.msra.mxu0 0
        %336 = vmatprep.subr.bf16.mxu0 0
        %337 = vmatpush1.bf16.msra.mxu0 0
        %338 = vmatprep.mubr.bf16.mxu0 0
        %339 = vmatmul.mubr.bf16.gmra.mrb[0].mxu0 %v304
        %v340 = vpop.f32.mrb[0].mxu0
        %v341 = vadd.f32 0.0, %v340
        %v342 = vpop.f32.mrb[0].mxu0
        %v343 = vpop.f32.mrb[0].mxu0
        %v344 = vpop.f32.mrb[0].mxu0
        %345 = vdwg.mxu0
        %v346 = vpack.c.bf16 %v341, %v341
        %348 = vrot.lane.b32.xlu0 %v346, 120
        %v349 = vpop.permute.xlu0 %348
        %350 = vrot.lane.b32.xlu0 %v346, 112
        %v351 = vpop.permute.xlu0 %350
        %352 = vrot.lane.b32.xlu0 %v346, 104
        %v353 = vpop.permute.xlu0 %352
        %v355 = vunpack.c.l.s4 1983009808
        %v356 = vunpack.c.0.s8 %v355
        %v357 = vlaneseq
        %v358 = vshrl.u32 %v357, 7
        %v359 = vsub.s32 %v356, %v358
        %v360 = vrot.slane %v346, %v359
        %v363 = vunpack.c.l.s4 1983009808
        %v364 = vunpack.c.0.s8 %v363
        %v365 = vlaneseq
        %v366 = vshrl.u32 %v365, 7
        %v367 = vsub.s32 %v364, %v366
        %v368 = vrot.slane %v351, %v367
        %v369 = vcombine.low %v360, %v368
        %v370 = vcombine.high %v360, %v368
        %v372 = vunpack.c.l.s4 1934713408
        %v373 = vunpack.c.0.s8 %v372
        %v374 = vlaneseq
        %v375 = vshrl.u32 %v374, 7
        %v376 = vsub.s32 %v373, %v375
        %v377 = vrot.slane %v369, %v376
        %v379 = vunpack.c.l.s4 1934713408
        %v380 = vunpack.c.0.s8 %v379
        %v381 = vlaneseq
        %v382 = vshrl.u32 %v381, 7
        %v383 = vsub.s32 %v380, %v382
        %v384 = vrot.slane %v370, %v383
        %v385 = vcombine.high %v377, 0
        %v386 = vcombine.high %v384, 0
        %v389 = vunpack.c.l.s4 1983009808
        %v390 = vunpack.c.0.s8 %v389
        %v391 = vlaneseq
        %v392 = vshrl.u32 %v391, 7
        %v393 = vsub.s32 %v390, %v392
        %v394 = vrot.slane %v349, %v393
        %v397 = vunpack.c.l.s4 1983009808
        %v398 = vunpack.c.0.s8 %v397
        %v399 = vlaneseq
        %v400 = vshrl.u32 %v399, 7
        %v401 = vsub.s32 %v398, %v400
        %v402 = vrot.slane %v353, %v401
        %v403 = vcombine.low %v394, %v402
        %v404 = vcombine.high %v394, %v402
        %v406 = vunpack.c.l.s4 1934713408
        %v407 = vunpack.c.0.s8 %v406
        %v408 = vlaneseq
        %v409 = vshrl.u32 %v408, 7
        %v410 = vsub.s32 %v407, %v409
        %v411 = vrot.slane %v403, %v410
        %v413 = vunpack.c.l.s4 1934713408
        %v414 = vunpack.c.0.s8 %v413
        %v415 = vlaneseq
        %v416 = vshrl.u32 %v415, 7
        %v417 = vsub.s32 %v414, %v416
        %v418 = vrot.slane %v404, %v417
        %v419 = vcombine.high %v411, 0
        %v420 = vcombine.high %v418, 0
        %v423 = vpack.i.b16 %v411, %v377
        %v425 = vshrl.u32 %v377, 16
        %v426 = vshrl.u32 %v411, 16
        %v427 = vpack.i.b16 %v426, %v425
        %v431 = vpack.i.b16 %v419, %v385
        %v433 = vshrl.u32 %v385, 16
        %v434 = vshrl.u32 %v419, 16
        %v435 = vpack.i.b16 %v434, %v433
        %v439 = vpack.i.b16 %v418, %v384
        %v441 = vshrl.u32 %v384, 16
        %v442 = vshrl.u32 %v418, 16
        %v443 = vpack.i.b16 %v442, %v441
        %v447 = vpack.i.b16 %v420, %v386
        %v449 = vshrl.u32 %v386, 16
        %v450 = vshrl.u32 %v420, 16
        %v451 = vpack.i.b16 %v450, %v449
        %v453 = vcombine.low %v423, %v439
        %v455 = vunpack.c.l.s4 1983009808
        %v456 = vunpack.c.0.s8 %v455
        %v457 = vlaneseq
        %v458 = vshrl.u32 %v457, 7
        %v459 = vsub.s32 %v456, %v458
        %v460 = vrot.slane %v453, %v459
        %v461 = vcombine.low %v431, %v447
        %v463 = vunpack.c.l.s4 1983009808
        %v464 = vunpack.c.0.s8 %v463
        %v465 = vlaneseq
        %v466 = vshrl.u32 %v465, 7
        %v467 = vsub.s32 %v464, %v466
        %v468 = vrot.slane %v461, %v467
        %v469 = vcombine.low %v460, %v468
        %v471 = vunpack.c.l.s4 1934713408
        %v472 = vunpack.c.0.s8 %v471
        %v473 = vlaneseq
        %v474 = vshrl.u32 %v473, 7
        %v475 = vsub.s32 %v472, %v474
        %v476 = vrot.slane %v469, %v475
        %v477 = vcombine.high %v476, 0
        %v478 = vcombine.low %v427, %v443
        %v480 = vunpack.c.l.s4 1983009808
        %v481 = vunpack.c.0.s8 %v480
        %v482 = vlaneseq
        %v483 = vshrl.u32 %v482, 7
        %v484 = vsub.s32 %v481, %v483
        %v485 = vrot.slane %v478, %v484
        %v486 = vcombine.low %v435, %v451
        %v488 = vunpack.c.l.s4 1983009808
        %v489 = vunpack.c.0.s8 %v488
        %v490 = vlaneseq
        %v491 = vshrl.u32 %v490, 7
        %v492 = vsub.s32 %v489, %v491
        %v493 = vrot.slane %v486, %v492
        %v494 = vcombine.low %v485, %v493
        %v496 = vunpack.c.l.s4 1934713408
        %v497 = vunpack.c.0.s8 %v496
        %v498 = vlaneseq
        %v499 = vshrl.u32 %v498, 7
        %v500 = vsub.s32 %v497, %v499
        %v501 = vrot.slane %v494, %v500
        %v502 = vcombine.high %v501, 0
        %v505 = vpack.i.b16 %v501, %v476
        %v506 = vshrl.u32 %v476, 16
        %v507 = vshrl.u32 %v501, 16
        %v508 = vpack.i.b16 %v507, %v506
        %v511 = vpack.i.b16 %v502, %v477
        %v512 = vshrl.u32 %v477, 16
        %v513 = vshrl.u32 %v502, 16
        %v514 = vpack.i.b16 %v513, %v512
        %515 = vrot.lane.b32.xlu0 %v346, 96
        %v516 = vpop.permute.xlu0 %515
        %517 = vrot.lane.b32.xlu0 %v349, 96
        %v518 = vpop.permute.xlu0 %517
        %v521 = vunpack.c.l.s4 1983009808
        %v522 = vunpack.c.0.s8 %v521
        %v523 = vlaneseq
        %v524 = vshrl.u32 %v523, 7
        %v525 = vsub.s32 %v522, %v524
        %v526 = vrot.slane %v516, %v525
        %v527 = vcombine.high %v526, 0
        %v529 = vunpack.c.l.s4 1934713408
        %v530 = vunpack.c.0.s8 %v529
        %v531 = vlaneseq
        %v532 = vshrl.u32 %v531, 7
        %v533 = vsub.s32 %v530, %v532
        %v534 = vrot.slane %v526, %v533
        %v536 = vunpack.c.l.s4 1934713408
        %v537 = vunpack.c.0.s8 %v536
        %v538 = vlaneseq
        %v539 = vshrl.u32 %v538, 7
        %v540 = vsub.s32 %v537, %v539
        %v541 = vrot.slane %v527, %v540
        %v542 = vcombine.high %v534, 0
        %v543 = vcombine.high %v541, 0
        %v546 = vunpack.c.l.s4 1983009808
        %v547 = vunpack.c.0.s8 %v546
        %v548 = vlaneseq
        %v549 = vshrl.u32 %v548, 7
        %v550 = vsub.s32 %v547, %v549
        %v551 = vrot.slane %v518, %v550
        %v552 = vcombine.high %v551, 0
        %v554 = vunpack.c.l.s4 1934713408
        %v555 = vunpack.c.0.s8 %v554
        %v556 = vlaneseq
        %v557 = vshrl.u32 %v556, 7
        %v558 = vsub.s32 %v555, %v557
        %v559 = vrot.slane %v551, %v558
        %v561 = vunpack.c.l.s4 1934713408
        %v562 = vunpack.c.0.s8 %v561
        %v563 = vlaneseq
        %v564 = vshrl.u32 %v563, 7
        %v565 = vsub.s32 %v562, %v564
        %v566 = vrot.slane %v552, %v565
        %v567 = vcombine.high %v559, 0
        %v568 = vcombine.high %v566, 0
        %v571 = vpack.i.b16 %v559, %v534
        %v573 = vshrl.u32 %v534, 16
        %v574 = vshrl.u32 %v559, 16
        %v575 = vpack.i.b16 %v574, %v573
        %v579 = vpack.i.b16 %v567, %v542
        %v581 = vshrl.u32 %v542, 16
        %v582 = vshrl.u32 %v567, 16
        %v583 = vpack.i.b16 %v582, %v581
        %v587 = vpack.i.b16 %v566, %v541
        %v589 = vshrl.u32 %v541, 16
        %v590 = vshrl.u32 %v566, 16
        %v591 = vpack.i.b16 %v590, %v589
        %v595 = vpack.i.b16 %v568, %v543
        %v597 = vshrl.u32 %v543, 16
        %v598 = vshrl.u32 %v568, 16
        %v599 = vpack.i.b16 %v598, %v597
        %v601 = vcombine.low %v571, %v587
        %v603 = vunpack.c.l.s4 1983009808
        %v604 = vunpack.c.0.s8 %v603
        %v605 = vlaneseq
        %v606 = vshrl.u32 %v605, 7
        %v607 = vsub.s32 %v604, %v606
        %v608 = vrot.slane %v601, %v607
        %v609 = vcombine.low %v579, %v595
        %v611 = vunpack.c.l.s4 1983009808
        %v612 = vunpack.c.0.s8 %v611
        %v613 = vlaneseq
        %v614 = vshrl.u32 %v613, 7
        %v615 = vsub.s32 %v612, %v614
        %v616 = vrot.slane %v609, %v615
        %v617 = vcombine.low %v608, %v616
        %v619 = vunpack.c.l.s4 1934713408
        %v620 = vunpack.c.0.s8 %v619
        %v621 = vlaneseq
        %v622 = vshrl.u32 %v621, 7
        %v623 = vsub.s32 %v620, %v622
        %v624 = vrot.slane %v617, %v623
        %v625 = vcombine.low %v575, %v591
        %v627 = vunpack.c.l.s4 1983009808
        %v628 = vunpack.c.0.s8 %v627
        %v629 = vlaneseq
        %v630 = vshrl.u32 %v629, 7
        %v631 = vsub.s32 %v628, %v630
        %v632 = vrot.slane %v625, %v631
        %v633 = vcombine.low %v583, %v599
        %v635 = vunpack.c.l.s4 1983009808
        %v636 = vunpack.c.0.s8 %v635
        %v637 = vlaneseq
        %v638 = vshrl.u32 %v637, 7
        %v639 = vsub.s32 %v636, %v638
        %v640 = vrot.slane %v633, %v639
        %v641 = vcombine.low %v632, %v640
        %v643 = vunpack.c.l.s4 1934713408
        %v644 = vunpack.c.0.s8 %v643
        %v645 = vlaneseq
        %v646 = vshrl.u32 %v645, 7
        %v647 = vsub.s32 %v644, %v646
        %v648 = vrot.slane %v641, %v647
        %v651 = vpack.i.b16 %v648, %v624
        %v652 = vshrl.u32 %v624, 16
        %v653 = vshrl.u32 %v648, 16
        %v654 = vpack.i.b16 %v653, %v652
        %655 = vrot.lane.b32.xlu0 %v346, 80
        %v656 = vpop.permute.xlu0 %655
        %657 = vrot.lane.b32.xlu0 %v349, 80
        %v658 = vpop.permute.xlu0 %657
        %v661 = vunpack.c.l.s4 1983009808
        %v662 = vunpack.c.0.s8 %v661
        %v663 = vlaneseq
        %v664 = vshrl.u32 %v663, 7
        %v665 = vsub.s32 %v662, %v664
        %v666 = vrot.slane %v656, %v665
        %v667 = vcombine.high %v666, 0
        %v669 = vunpack.c.l.s4 1934713408
        %v670 = vunpack.c.0.s8 %v669
        %v671 = vlaneseq
        %v672 = vshrl.u32 %v671, 7
        %v673 = vsub.s32 %v670, %v672
        %v674 = vrot.slane %v666, %v673
        %v676 = vunpack.c.l.s4 1934713408
        %v677 = vunpack.c.0.s8 %v676
        %v678 = vlaneseq
        %v679 = vshrl.u32 %v678, 7
        %v680 = vsub.s32 %v677, %v679
        %v681 = vrot.slane %v667, %v680
        %v682 = vcombine.high %v674, 0
        %v683 = vcombine.high %v681, 0
        %v686 = vunpack.c.l.s4 1983009808
        %v687 = vunpack.c.0.s8 %v686
        %v688 = vlaneseq
        %v689 = vshrl.u32 %v688, 7
        %v690 = vsub.s32 %v687, %v689
        %v691 = vrot.slane %v658, %v690
        %v692 = vcombine.high %v691, 0
        %v694 = vunpack.c.l.s4 1934713408
        %v695 = vunpack.c.0.s8 %v694
        %v696 = vlaneseq
        %v697 = vshrl.u32 %v696, 7
        %v698 = vsub.s32 %v695, %v697
        %v699 = vrot.slane %v691, %v698
        %v701 = vunpack.c.l.s4 1934713408
        %v702 = vunpack.c.0.s8 %v701
        %v703 = vlaneseq
        %v704 = vshrl.u32 %v703, 7
        %v705 = vsub.s32 %v702, %v704
        %v706 = vrot.slane %v692, %v705
        %v707 = vcombine.high %v699, 0
        %v708 = vcombine.high %v706, 0
        %v711 = vpack.i.b16 %v699, %v674
        %v713 = vshrl.u32 %v674, 16
        %v714 = vshrl.u32 %v699, 16
        %v715 = vpack.i.b16 %v714, %v713
        %v719 = vpack.i.b16 %v707, %v682
        %v721 = vshrl.u32 %v682, 16
        %v722 = vshrl.u32 %v707, 16
        %v723 = vpack.i.b16 %v722, %v721
        %v727 = vpack.i.b16 %v706, %v681
        %v729 = vshrl.u32 %v681, 16
        %v730 = vshrl.u32 %v706, 16
        %v731 = vpack.i.b16 %v730, %v729
        %v735 = vpack.i.b16 %v708, %v683
        %v737 = vshrl.u32 %v683, 16
        %v738 = vshrl.u32 %v708, 16
        %v739 = vpack.i.b16 %v738, %v737
        %v741 = vcombine.low %v711, %v727
        %v743 = vunpack.c.l.s4 1983009808
        %v744 = vunpack.c.0.s8 %v743
        %v745 = vlaneseq
        %v746 = vshrl.u32 %v745, 7
        %v747 = vsub.s32 %v744, %v746
        %v748 = vrot.slane %v741, %v747
        %v749 = vcombine.low %v719, %v735
        %v751 = vunpack.c.l.s4 1983009808
        %v752 = vunpack.c.0.s8 %v751
        %v753 = vlaneseq
        %v754 = vshrl.u32 %v753, 7
        %v755 = vsub.s32 %v752, %v754
        %v756 = vrot.slane %v749, %v755
        %v757 = vcombine.low %v748, %v756
        %v759 = vunpack.c.l.s4 1934713408
        %v760 = vunpack.c.0.s8 %v759
        %v761 = vlaneseq
        %v762 = vshrl.u32 %v761, 7
        %v763 = vsub.s32 %v760, %v762
        %v764 = vrot.slane %v757, %v763
        %v765 = vcombine.low %v715, %v731
        %v767 = vunpack.c.l.s4 1983009808
        %v768 = vunpack.c.0.s8 %v767
        %v769 = vlaneseq
        %v770 = vshrl.u32 %v769, 7
        %v771 = vsub.s32 %v768, %v770
        %v772 = vrot.slane %v765, %v771
        %v773 = vcombine.low %v723, %v739
        %v775 = vunpack.c.l.s4 1983009808
        %v776 = vunpack.c.0.s8 %v775
        %v777 = vlaneseq
        %v778 = vshrl.u32 %v777, 7
        %v779 = vsub.s32 %v776, %v778
        %v780 = vrot.slane %v773, %v779
        %v781 = vcombine.low %v772, %v780
        %v783 = vunpack.c.l.s4 1934713408
        %v784 = vunpack.c.0.s8 %v783
        %v785 = vlaneseq
        %v786 = vshrl.u32 %v785, 7
        %v787 = vsub.s32 %v784, %v786
        %v788 = vrot.slane %v781, %v787
        %v791 = vpack.i.b16 %v788, %v764
        %v792 = vshrl.u32 %v764, 16
        %v793 = vshrl.u32 %v788, 16
        %v794 = vpack.i.b16 %v793, %v792
        %vm795 = vcmask 64512
        %v797 = vsel %vm795, %v505, 0
        %v800 = vsel %vm795, %v651, 0
        %802 = vmatprep.subr.bf16.mxu0 0
        %803 = vmatpush1.bf16.xpose.msra.mxu0 %v800
        %804 = vmatprep.subr.bf16.mxu0 0
        %805 = vmatpush1.bf16.xpose.msra.mxu0 0
        %806 = vmatprep.subr.bf16.mxu0 0
        %807 = vmatpush1.bf16.xpose.msra.mxu0 0
        %808 = vmatprep.subr.bf16.mxu0 0
        %809 = vmatpush1.bf16.xpose.msra.mxu0 0
        %810 = vmatprep.subr.bf16.mxu0 0
        %811 = vmatpush1.bf16.xpose.msra.mxu0 0
        %812 = vmatprep.subr.bf16.mxu0 0
        %813 = vmatpush1.bf16.xpose.msra.mxu0 0
        %814 = vmatprep.subr.bf16.mxu0 0
        %815 = vmatpush1.bf16.xpose.msra.mxu0 0
        %816 = vmatprep.subr.bf16.mxu0 0
        %817 = vmatpush1.bf16.xpose.msra.mxu0 0
        %818 = vmatprep.subr.bf16.mxu0 0
        %819 = vmatpush1.bf16.xpose.msra.mxu0 0
        %820 = vmatprep.subr.bf16.mxu0 0
        %821 = vmatpush1.bf16.xpose.msra.mxu0 0
        %822 = vmatprep.subr.bf16.mxu0 0
        %823 = vmatpush1.bf16.xpose.msra.mxu0 0
        %824 = vmatprep.subr.bf16.mxu0 0
        %825 = vmatpush1.bf16.xpose.msra.mxu0 0
        %826 = vmatprep.subr.bf16.mxu0 0
        %827 = vmatpush1.bf16.xpose.msra.mxu0 0
        %828 = vmatprep.subr.bf16.mxu0 0
        %829 = vmatpush1.bf16.xpose.msra.mxu0 0
        %830 = vmatprep.subr.bf16.mxu0 0
        %831 = vmatpush1.bf16.xpose.msra.mxu0 0
        %832 = vmatprep.subr.bf16.mxu0 0
        %833 = vmatpush1.bf16.xpose.msra.mxu0 0
        %834 = vmatprep.mubr.bf16.mxu0 0
        %835 = vmatmul.mubr.bf16.gmra.mrb[0].mxu0 %v797
        %v836 = vpop.f32.mrb[0].mxu0
        %v837 = vadd.f32 0.0, %v836
        %v838 = vpop.f32.mrb[0].mxu0
        %v839 = vpop.f32.mrb[0].mxu0
        %v840 = vpop.f32.mrb[0].mxu0
        %841 = vdwg.mxu0
        %v843 = vsel %vm795, %v508, 0
        %845 = vmatprep.subr.bf16.mxu0 0
        %846 = vmatpush1.bf16.xpose.msra.mxu0 %v800
        %847 = vmatprep.subr.bf16.mxu0 0
        %848 = vmatpush1.bf16.xpose.msra.mxu0 0
        %849 = vmatprep.subr.bf16.mxu0 0
        %850 = vmatpush1.bf16.xpose.msra.mxu0 0
        %851 = vmatprep.subr.bf16.mxu0 0
        %852 = vmatpush1.bf16.xpose.msra.mxu0 0
        %853 = vmatprep.subr.bf16.mxu0 0
        %854 = vmatpush1.bf16.xpose.msra.mxu0 0
        %855 = vmatprep.subr.bf16.mxu0 0
        %856 = vmatpush1.bf16.xpose.msra.mxu0 0
        %857 = vmatprep.subr.bf16.mxu0 0
        %858 = vmatpush1.bf16.xpose.msra.mxu0 0
        %859 = vmatprep.subr.bf16.mxu0 0
        %860 = vmatpush1.bf16.xpose.msra.mxu0 0
        %861 = vmatprep.subr.bf16.mxu0 0
        %862 = vmatpush1.bf16.xpose.msra.mxu0 0
        %863 = vmatprep.subr.bf16.mxu0 0
        %864 = vmatpush1.bf16.xpose.msra.mxu0 0
        %865 = vmatprep.subr.bf16.mxu0 0
        %866 = vmatpush1.bf16.xpose.msra.mxu0 0
        %867 = vmatprep.subr.bf16.mxu0 0
        %868 = vmatpush1.bf16.xpose.msra.mxu0 0
        %869 = vmatprep.subr.bf16.mxu0 0
        %870 = vmatpush1.bf16.xpose.msra.mxu0 0
        %871 = vmatprep.subr.bf16.mxu0 0
        %872 = vmatpush1.bf16.xpose.msra.mxu0 0
        %873 = vmatprep.subr.bf16.mxu0 0
        %874 = vmatpush1.bf16.xpose.msra.mxu0 0
        %875 = vmatprep.subr.bf16.mxu0 0
        %876 = vmatpush1.bf16.xpose.msra.mxu0 0
        %877 = vmatprep.mubr.bf16.mxu0 0
        %878 = vmatmul.mubr.bf16.gmra.mrb[0].mxu0 %v843
        %v879 = vpop.f32.mrb[0].mxu0
        %v880 = vadd.f32 0.0, %v879
        %v881 = vpop.f32.mrb[0].mxu0
        %v882 = vpop.f32.mrb[0].mxu0
        %v883 = vpop.f32.mrb[0].mxu0
        %884 = vdwg.mxu0
        %v886 = vsel %vm795, %v511, 0
        %v889 = vsel %vm795, %v654, 0
        %891 = vmatprep.subr.bf16.mxu0 0
        %892 = vmatpush1.bf16.xpose.msra.mxu0 %v889
        %893 = vmatprep.subr.bf16.mxu0 0
        %894 = vmatpush1.bf16.xpose.msra.mxu0 0
        %895 = vmatprep.subr.bf16.mxu0 0
        %896 = vmatpush1.bf16.xpose.msra.mxu0 0
        %897 = vmatprep.subr.bf16.mxu0 0
        %898 = vmatpush1.bf16.xpose.msra.mxu0 0
        %899 = vmatprep.subr.bf16.mxu0 0
        %900 = vmatpush1.bf16.xpose.msra.mxu0 0
        %901 = vmatprep.subr.bf16.mxu0 0
        %902 = vmatpush1.bf16.xpose.msra.mxu0 0
        %903 = vmatprep.subr.bf16.mxu0 0
        %904 = vmatpush1.bf16.xpose.msra.mxu0 0
        %905 = vmatprep.subr.bf16.mxu0 0
        %906 = vmatpush1.bf16.xpose.msra.mxu0 0
        %907 = vmatprep.subr.bf16.mxu0 0
        %908 = vmatpush1.bf16.xpose.msra.mxu0 0
        %909 = vmatprep.subr.bf16.mxu0 0
        %910 = vmatpush1.bf16.xpose.msra.mxu0 0
        %911 = vmatprep.subr.bf16.mxu0 0
        %912 = vmatpush1.bf16.xpose.msra.mxu0 0
        %913 = vmatprep.subr.bf16.mxu0 0
        %914 = vmatpush1.bf16.xpose.msra.mxu0 0
        %915 = vmatprep.subr.bf16.mxu0 0
        %916 = vmatpush1.bf16.xpose.msra.mxu0 0
        %917 = vmatprep.subr.bf16.mxu0 0
        %918 = vmatpush1.bf16.xpose.msra.mxu0 0
        %919 = vmatprep.subr.bf16.mxu0 0
        %920 = vmatpush1.bf16.xpose.msra.mxu0 0
        %921 = vmatprep.subr.bf16.mxu0 0
        %922 = vmatpush1.bf16.xpose.msra.mxu0 0
        %923 = vmatprep.mubr.bf16.mxu0 0
        %924 = vmatmul.mubr.bf16.gmra.mrb[0].mxu0 %v886
        %v925 = vpop.f32.mrb[0].mxu0
        %v926 = vadd.f32 0.0, %v925
        %v927 = vpop.f32.mrb[0].mxu0
        %v928 = vpop.f32.mrb[0].mxu0
        %v929 = vpop.f32.mrb[0].mxu0
        %930 = vdwg.mxu0
        %v932 = vsel %vm795, %v514, 0
        %934 = vmatprep.subr.bf16.mxu0 0
        %935 = vmatpush1.bf16.xpose.msra.mxu0 %v889
        %936 = vmatprep.subr.bf16.mxu0 0
        %937 = vmatpush1.bf16.xpose.msra.mxu0 0
        %938 = vmatprep.subr.bf16.mxu0 0
        %939 = vmatpush1.bf16.xpose.msra.mxu0 0
        %940 = vmatprep.subr.bf16.mxu0 0
        %941 = vmatpush1.bf16.xpose.msra.mxu0 0
        %942 = vmatprep.subr.bf16.mxu0 0
        %943 = vmatpush1.bf16.xpose.msra.mxu0 0
        %944 = vmatprep.subr.bf16.mxu0 0
        %945 = vmatpush1.bf16.xpose.msra.mxu0 0
        %946 = vmatprep.subr.bf16.mxu0 0
        %947 = vmatpush1.bf16.xpose.msra.mxu0 0
        %948 = vmatprep.subr.bf16.mxu0 0
        %949 = vmatpush1.bf16.xpose.msra.mxu0 0
        %950 = vmatprep.subr.bf16.mxu0 0
        %951 = vmatpush1.bf16.xpose.msra.mxu0 0
        %952 = vmatprep.subr.bf16.mxu0 0
        %953 = vmatpush1.bf16.xpose.msra.mxu0 0
        %954 = vmatprep.subr.bf16.mxu0 0
        %955 = vmatpush1.bf16.xpose.msra.mxu0 0
        %956 = vmatprep.subr.bf16.mxu0 0
        %957 = vmatpush1.bf16.xpose.msra.mxu0 0
        %958 = vmatprep.subr.bf16.mxu0 0
        %959 = vmatpush1.bf16.xpose.msra.mxu0 0
        %960 = vmatprep.subr.bf16.mxu0 0
        %961 = vmatpush1.bf16.xpose.msra.mxu0 0
        %962 = vmatprep.subr.bf16.mxu0 0
        %963 = vmatpush1.bf16.xpose.msra.mxu0 0
        %964 = vmatprep.subr.bf16.mxu0 0
        %965 = vmatpush1.bf16.xpose.msra.mxu0 0
        %966 = vmatprep.mubr.bf16.mxu0 0
        %967 = vmatmul.mubr.bf16.gmra.mrb[0].mxu0 %v932
        %v968 = vpop.f32.mrb[0].mxu0
        %v969 = vadd.f32 0.0, %v968
        %v970 = vpop.f32.mrb[0].mxu0
        %v971 = vpop.f32.mrb[0].mxu0
        %v972 = vpop.f32.mrb[0].mxu0
        %973 = vdwg.mxu0
        %v974 = vmul.f32 %v837, 0.35355338
        %v975 = vmul.f32 %v880, 0.35355338
        %v976 = vmul.f32 %v926, 0.35355338
        %v977 = vmul.f32 %v969, 0.35355338
        %v978 = vadd.f32 %v974, %v281
        %v979 = vadd.f32 %v975, %v281
        %v980 = vadd.f32 %v976, %v281
        %v981 = vadd.f32 %v977, %v281
        %v982 = vsel %vm795, %v978, -inf
        %983 = vmax.xlane.f32.xlu0 %v982
        %v984 = vpop.xlane.xlu0 %983
        %v985 = vsel %vm795, %v979, -inf
        %986 = vmax.xlane.f32.xlu0 %v985
        %v987 = vpop.xlane.xlu0 %986
        %v988 = vsel %vm795, %v980, -inf
        %989 = vmax.xlane.f32.xlu0 %v988
        %v990 = vpop.xlane.xlu0 %989
        %v991 = vsel %vm795, %v981, -inf
        %992 = vmax.xlane.f32.xlu0 %v991
        %v993 = vpop.xlane.xlu0 %992
        %v994 = vsub.f32 %v978, %v984
        %v995 = vsub.f32 %v979, %v987
        %v996 = vsub.f32 %v980, %v990
        %v997 = vsub.f32 %v981, %v993
        %v998 = vmul.f32 %v994, 1.442695
        %v999 = vpow.pop %v998
        %v1000 = vmul.f32 %v995, 1.442695
        %v1001 = vpow.pop %v1000
        %v1002 = vmul.f32 %v996, 1.442695
        %v1003 = vpow.pop %v1002
        %v1004 = vmul.f32 %v997, 1.442695
        %v1005 = vpow.pop %v1004
        %v1006 = vsel %vm795, %v999, 0.0
        %1007 = vadd.xlane.f32.xlu0 %v1006
        %v1008 = vpop.xlane.xlu0 %1007
        %v1009 = vsel %vm795, %v1001, 0.0
        %1010 = vadd.xlane.f32.xlu0 %v1009
        %v1011 = vpop.xlane.xlu0 %1010
        %v1012 = vsel %vm795, %v1003, 0.0
        %1013 = vadd.xlane.f32.xlu0 %v1012
        %v1014 = vpop.xlane.xlu0 %1013
        %v1015 = vsel %vm795, %v1005, 0.0
        %1016 = vadd.xlane.f32.xlu0 %v1015
        %v1017 = vpop.xlane.xlu0 %1016
        %v1018 = vrcp.pop %v1008
        %v1019 = vrcp.pop %v1011
        %v1020 = vrcp.pop %v1014
        %v1021 = vrcp.pop %v1017
        %v1022 = vmul.f32 %v999, %v1018
        %v1023 = vmul.f32 %v1001, %v1019
        %v1024 = vmul.f32 %v1003, %v1020
        %v1025 = vmul.f32 %v1005, %v1021
        %v1026 = vpack.c.bf16 %v1022, %v1022
        %v1027 = vpack.c.bf16 %v1023, %v1023
        %v1028 = vpack.c.bf16 %v1024, %v1024
        %v1029 = vpack.c.bf16 %v1025, %v1025
        %v1031 = vsel %vm795, %v1026, 0
        %vm1033 = vcmask 1043456
        %v1035 = vsel %vm1033, %v791, 0
        %1037 = vmatprep.subr.bf16.mxu0 0
        %1038 = vmatpush1.bf16.msra.mxu0 %v1035
        %1039 = vmatprep.subr.bf16.mxu0 0
        %1040 = vmatpush1.bf16.msra.mxu0 0
        %1041 = vmatprep.subr.bf16.mxu0 0
        %1042 = vmatpush1.bf16.msra.mxu0 0
        %1043 = vmatprep.subr.bf16.mxu0 0
        %1044 = vmatpush1.bf16.msra.mxu0 0
        %1045 = vmatprep.subr.bf16.mxu0 0
        %1046 = vmatpush1.bf16.msra.mxu0 0
        %1047 = vmatprep.subr.bf16.mxu0 0
        %1048 = vmatpush1.bf16.msra.mxu0 0
        %1049 = vmatprep.subr.bf16.mxu0 0
        %1050 = vmatpush1.bf16.msra.mxu0 0
        %1051 = vmatprep.subr.bf16.mxu0 0
        %1052 = vmatpush1.bf16.msra.mxu0 0
        %1053 = vmatprep.subr.bf16.mxu0 0
        %1054 = vmatpush1.bf16.msra.mxu0 0
        %1055 = vmatprep.subr.bf16.mxu0 0
        %1056 = vmatpush1.bf16.msra.mxu0 0
        %1057 = vmatprep.subr.bf16.mxu0 0
        %1058 = vmatpush1.bf16.msra.mxu0 0
        %1059 = vmatprep.subr.bf16.mxu0 0
        %1060 = vmatpush1.bf16.msra.mxu0 0
        %1061 = vmatprep.subr.bf16.mxu0 0
        %1062 = vmatpush1.bf16.msra.mxu0 0
        %1063 = vmatprep.subr.bf16.mxu0 0
        %1064 = vmatpush1.bf16.msra.mxu0 0
        %1065 = vmatprep.subr.bf16.mxu0 0
        %1066 = vmatpush1.bf16.msra.mxu0 0
        %1067 = vmatprep.subr.bf16.mxu0 0
        %1068 = vmatpush1.bf16.msra.mxu0 0
        %1069 = vmatprep.mubr.bf16.mxu0 0
        %1070 = vmatmul.mubr.bf16.gmra.mrb[0].mxu0 %v1031
        %v1071 = vpop.f32.mrb[0].mxu0
        %v1072 = vadd.f32 0.0, %v1071
        %v1073 = vpop.f32.mrb[0].mxu0
        %v1074 = vpop.f32.mrb[0].mxu0
        %v1075 = vpop.f32.mrb[0].mxu0
        %1076 = vdwg.mxu0
        %v1078 = vsel %vm795, %v1027, 0
        %1080 = vmatprep.subr.bf16.mxu0 0
        %1081 = vmatpush1.bf16.msra.mxu0 %v1035
        %1082 = vmatprep.subr.bf16.mxu0 0
        %1083 = vmatpush1.bf16.msra.mxu0 0
        %1084 = vmatprep.subr.bf16.mxu0 0
        %1085 = vmatpush1.bf16.msra.mxu0 0
        %1086 = vmatprep.subr.bf16.mxu0 0
        %1087 = vmatpush1.bf16.msra.mxu0 0
        %1088 = vmatprep.subr.bf16.mxu0 0
        %1089 = vmatpush1.bf16.msra.mxu0 0
        %1090 = vmatprep.subr.bf16.mxu0 0
        %1091 = vmatpush1.bf16.msra.mxu0 0
        %1092 = vmatprep.subr.bf16.mxu0 0
        %1093 = vmatpush1.bf16.msra.mxu0 0
        %1094 = vmatprep.subr.bf16.mxu0 0
        %1095 = vmatpush1.bf16.msra.mxu0 0
        %1096 = vmatprep.subr.bf16.mxu0 0
        %1097 = vmatpush1.bf16.msra.mxu0 0
        %1098 = vmatprep.subr.bf16.mxu0 0
        %1099 = vmatpush1.bf16.msra.mxu0 0
        %1100 = vmatprep.subr.bf16.mxu0 0
        %1101 = vmatpush1.bf16.msra.mxu0 0
        %1102 = vmatprep.subr.bf16.mxu0 0
        %1103 = vmatpush1.bf16.msra.mxu0 0
        %1104 = vmatprep.subr.bf16.mxu0 0
        %1105 = vmatpush1.bf16.msra.mxu0 0
        %1106 = vmatprep.subr.bf16.mxu0 0
        %1107 = vmatpush1.bf16.msra.mxu0 0
        %1108 = vmatprep.subr.bf16.mxu0 0
        %1109 = vmatpush1.bf16.msra.mxu0 0
        %1110 = vmatprep.subr.bf16.mxu0 0
        %1111 = vmatpush1.bf16.msra.mxu0 0
        %1112 = vmatprep.mubr.bf16.mxu0 0
        %1113 = vmatmul.mubr.bf16.gmra.mrb[0].mxu0 %v1078
        %v1114 = vpop.f32.mrb[0].mxu0
        %v1115 = vadd.f32 0.0, %v1114
        %v1116 = vpop.f32.mrb[0].mxu0
        %v1117 = vpop.f32.mrb[0].mxu0
        %v1118 = vpop.f32.mrb[0].mxu0
        %1119 = vdwg.mxu0
        %v1121 = vsel %vm795, %v1028, 0
        %v1124 = vsel %vm1033, %v794, 0
        %1126 = vmatprep.subr.bf16.mxu0 0
        %1127 = vmatpush1.bf16.msra.mxu0 %v1124
        %1128 = vmatprep.subr.bf16.mxu0 0
        %1129 = vmatpush1.bf16.msra.mxu0 0
        %1130 = vmatprep.subr.bf16.mxu0 0
        %1131 = vmatpush1.bf16.msra.mxu0 0
        %1132 = vmatprep.subr.bf16.mxu0 0
        %1133 = vmatpush1.bf16.msra.mxu0 0
        %1134 = vmatprep.subr.bf16.mxu0 0
        %1135 = vmatpush1.bf16.msra.mxu0 0
        %1136 = vmatprep.subr.bf16.mxu0 0
        %1137 = vmatpush1.bf16.msra.mxu0 0
        %1138 = vmatprep.subr.bf16.mxu0 0
        %1139 = vmatpush1.bf16.msra.mxu0 0
        %1140 = vmatprep.subr.bf16.mxu0 0
        %1141 = vmatpush1.bf16.msra.mxu0 0
        %1142 = vmatprep.subr.bf16.mxu0 0
        %1143 = vmatpush1.bf16.msra.mxu0 0
        %1144 = vmatprep.subr.bf16.mxu0 0
        %1145 = vmatpush1.bf16.msra.mxu0 0
        %1146 = vmatprep.subr.bf16.mxu0 0
        %1147 = vmatpush1.bf16.msra.mxu0 0
        %1148 = vmatprep.subr.bf16.mxu0 0
        %1149 = vmatpush1.bf16.msra.mxu0 0
        %1150 = vmatprep.subr.bf16.mxu0 0
        %1151 = vmatpush1.bf16.msra.mxu0 0
        %1152 = vmatprep.subr.bf16.mxu0 0
        %1153 = vmatpush1.bf16.msra.mxu0 0
        %1154 = vmatprep.subr.bf16.mxu0 0
        %1155 = vmatpush1.bf16.msra.mxu0 0
        %1156 = vmatprep.subr.bf16.mxu0 0
        %1157 = vmatpush1.bf16.msra.mxu0 0
        %1158 = vmatprep.mubr.bf16.mxu0 0
        %1159 = vmatmul.mubr.bf16.gmra.mrb[0].mxu0 %v1121
        %v1160 = vpop.f32.mrb[0].mxu0
        %v1161 = vadd.f32 0.0, %v1160
        %v1162 = vpop.f32.mrb[0].mxu0
        %v1163 = vpop.f32.mrb[0].mxu0
        %v1164 = vpop.f32.mrb[0].mxu0
        %1165 = vdwg.mxu0
        %v1167 = vsel %vm795, %v1029, 0
        %1169 = vmatprep.subr.bf16.mxu0 0
        %1170 = vmatpush1.bf16.msra.mxu0 %v1124
        %1171 = vmatprep.subr.bf16.mxu0 0
        %1172 = vmatpush1.bf16.msra.mxu0 0
        %1173 = vmatprep.subr.bf16.mxu0 0
        %1174 = vmatpush1.bf16.msra.mxu0 0
        %1175 = vmatprep.subr.bf16.mxu0 0
        %1176 = vmatpush1.bf16.msra.mxu0 0
        %1177 = vmatprep.subr.bf16.mxu0 0
        %1178 = vmatpush1.bf16.msra.mxu0 0
        %1179 = vmatprep.subr.bf16.mxu0 0
        %1180 = vmatpush1.bf16.msra.mxu0 0
        %1181 = vmatprep.subr.bf16.mxu0 0
        %1182 = vmatpush1.bf16.msra.mxu0 0
        %1183 = vmatprep.subr.bf16.mxu0 0
        %1184 = vmatpush1.bf16.msra.mxu0 0
        %1185 = vmatprep.subr.bf16.mxu0 0
        %1186 = vmatpush1.bf16.msra.mxu0 0
        %1187 = vmatprep.subr.bf16.mxu0 0
        %1188 = vmatpush1.bf16.msra.mxu0 0
        %1189 = vmatprep.subr.bf16.mxu0 0
        %1190 = vmatpush1.bf16.msra.mxu0 0
        %1191 = vmatprep.subr.bf16.mxu0 0
        %1192 = vmatpush1.bf16.msra.mxu0 0
        %1193 = vmatprep.subr.bf16.mxu0 0
        %1194 = vmatpush1.bf16.msra.mxu0 0
        %1195 = vmatprep.subr.bf16.mxu0 0
        %1196 = vmatpush1.bf16.msra.mxu0 0
        %1197 = vmatprep.subr.bf16.mxu0 0
        %1198 = vmatpush1.bf16.msra.mxu0 0
        %1199 = vmatprep.subr.bf16.mxu0 0
        %1200 = vmatpush1.bf16.msra.mxu0 0
        %1201 = vmatprep.mubr.bf16.mxu0 0
        %1202 = vmatmul.mubr.bf16.gmra.mrb[0].mxu0 %v1167
        %v1203 = vpop.f32.mrb[0].mxu0
        %v1204 = vadd.f32 0.0, %v1203
        %v1205 = vpop.f32.mrb[0].mxu0
        %v1206 = vpop.f32.mrb[0].mxu0
        %v1207 = vpop.f32.mrb[0].mxu0
        %1208 = vdwg.mxu0
        %v1209 = vcombine.low %v1072, %v1161
        %v1210 = vcombine.high %v1072, %v1161
        %v1212 = vunpack.c.l.s4 1983009808
        %v1213 = vunpack.c.0.s8 %v1212
        %v1214 = vlaneseq
        %v1215 = vshrl.u32 %v1214, 7
        %v1216 = vsub.s32 %v1213, %v1215
        %v1217 = vrot.slane %v1209, %v1216
        %v1219 = vunpack.c.l.s4 1983009808
        %v1220 = vunpack.c.0.s8 %v1219
        %v1221 = vlaneseq
        %v1222 = vshrl.u32 %v1221, 7
        %v1223 = vsub.s32 %v1220, %v1222
        %v1224 = vrot.slane %v1210, %v1223
        %v1225 = vcombine.low %v1115, %v1204
        %v1226 = vcombine.high %v1115, %v1204
        %v1228 = vunpack.c.l.s4 1983009808
        %v1229 = vunpack.c.0.s8 %v1228
        %v1230 = vlaneseq
        %v1231 = vshrl.u32 %v1230, 7
        %v1232 = vsub.s32 %v1229, %v1231
        %v1233 = vrot.slane %v1225, %v1232
        %v1235 = vunpack.c.l.s4 1983009808
        %v1236 = vunpack.c.0.s8 %v1235
        %v1237 = vlaneseq
        %v1238 = vshrl.u32 %v1237, 7
        %v1239 = vsub.s32 %v1236, %v1238
        %v1240 = vrot.slane %v1226, %v1239
        %v1241 = vcombine.low %v1217, %v1233
        %v1242 = vcombine.high %v1217, %v1233
        %v1244 = vunpack.c.l.s4 1934713408
        %v1245 = vunpack.c.0.s8 %v1244
        %v1246 = vlaneseq
        %v1247 = vshrl.u32 %v1246, 7
        %v1248 = vsub.s32 %v1245, %v1247
        %v1249 = vrot.slane %v1241, %v1248
        %v1251 = vunpack.c.l.s4 1934713408
        %v1252 = vunpack.c.0.s8 %v1251
        %v1253 = vlaneseq
        %v1254 = vshrl.u32 %v1253, 7
        %v1255 = vsub.s32 %v1252, %v1254
        %v1256 = vrot.slane %v1242, %v1255
        %v1257 = vcombine.low %v1224, %v1240
        %v1258 = vcombine.high %v1224, %v1240
        %v1260 = vunpack.c.l.s4 1934713408
        %v1261 = vunpack.c.0.s8 %v1260
        %v1262 = vlaneseq
        %v1263 = vshrl.u32 %v1262, 7
        %v1264 = vsub.s32 %v1261, %v1263
        %v1265 = vrot.slane %v1257, %v1264
        %v1267 = vunpack.c.l.s4 1934713408
        %v1268 = vunpack.c.0.s8 %v1267
        %v1269 = vlaneseq
        %v1270 = vshrl.u32 %v1269, 7
        %v1271 = vsub.s32 %v1268, %v1270
        %v1272 = vrot.slane %v1258, %v1271
        %v1273 = vcombine.high %v1249, 0.0
        %v1274 = vcombine.high %v1256, 0.0
        %v1275 = vcombine.high %v1265, 0.0
        %v1276 = vcombine.high %v1272, 0.0
        %v1277 = vcombine.low %v1249, %v1256
        %v1279 = vunpack.c.l.s4 1983009808
        %v1280 = vunpack.c.0.s8 %v1279
        %v1281 = vlaneseq
        %v1282 = vshrl.u32 %v1281, 7
        %v1283 = vsub.s32 %v1280, %v1282
        %v1284 = vrot.slane %v1277, %v1283
        %v1285 = vcombine.low %v1273, %v1274
        %v1287 = vunpack.c.l.s4 1983009808
        %v1288 = vunpack.c.0.s8 %v1287
        %v1289 = vlaneseq
        %v1290 = vshrl.u32 %v1289, 7
        %v1291 = vsub.s32 %v1288, %v1290
        %v1292 = vrot.slane %v1285, %v1291
        %v1293 = vcombine.low %v1265, %v1272
        %v1295 = vunpack.c.l.s4 1983009808
        %v1296 = vunpack.c.0.s8 %v1295
        %v1297 = vlaneseq
        %v1298 = vshrl.u32 %v1297, 7
        %v1299 = vsub.s32 %v1296, %v1298
        %v1300 = vrot.slane %v1293, %v1299
        %v1301 = vcombine.low %v1275, %v1276
        %v1303 = vunpack.c.l.s4 1983009808
        %v1304 = vunpack.c.0.s8 %v1303
        %v1305 = vlaneseq
        %v1306 = vshrl.u32 %v1305, 7
        %v1307 = vsub.s32 %v1304, %v1306
        %v1308 = vrot.slane %v1301, %v1307
        %v1309 = vcombine.low %v1284, %v1292
        %v1310 = vcombine.high %v1284, %v1292
        %v1312 = vunpack.c.l.s4 1934713408
        %v1313 = vunpack.c.0.s8 %v1312
        %v1314 = vlaneseq
        %v1315 = vshrl.u32 %v1314, 7
        %v1316 = vsub.s32 %v1313, %v1315
        %v1317 = vrot.slane %v1309, %v1316
        %v1319 = vunpack.c.l.s4 1934713408
        %v1320 = vunpack.c.0.s8 %v1319
        %v1321 = vlaneseq
        %v1322 = vshrl.u32 %v1321, 7
        %v1323 = vsub.s32 %v1320, %v1322
        %v1324 = vrot.slane %v1310, %v1323
        %v1325 = vcombine.low %v1300, %v1308
        %v1326 = vcombine.high %v1300, %v1308
        %v1328 = vunpack.c.l.s4 1934713408
        %v1329 = vunpack.c.0.s8 %v1328
        %v1330 = vlaneseq
        %v1331 = vshrl.u32 %v1330, 7
        %v1332 = vsub.s32 %v1329, %v1331
        %v1333 = vrot.slane %v1325, %v1332
        %v1335 = vunpack.c.l.s4 1934713408
        %v1336 = vunpack.c.0.s8 %v1335
        %v1337 = vlaneseq
        %v1338 = vshrl.u32 %v1337, 7
        %v1339 = vsub.s32 %v1336, %v1338
        %v1340 = vrot.slane %v1326, %v1339
        %v1341 = vcombine.low %v1317, %v1333
        %v1342 = vcombine.high %v1317, %v1333
        %v1343 = vcombine.low %v1324, %v1340
        %v1344 = vcombine.high %v1324, %v1340
        %1346 = vrot.lane.b32.xlu0 %v1342, 8
        %v1347 = vpop.permute.xlu0 %1346
        %1350 = vrot.lane.b32.xlu0 %v1343, 16
        %v1351 = vpop.permute.xlu0 %1350
        %1354 = vrot.lane.b32.xlu0 %v1344, 24
        %v1355 = vpop.permute.xlu0 %1354
        %v1357 = vsel %vm795, %v1341, %v1347
        %vm1358 = vcmask 130048
        %v1359 = vsel %vm1358, %v1357, %v1351
        %vm1360 = vcmask 195584
        %v1361 = vsel %vm1360, %v1359, %v1355
        %v1362 = vpack.c.bf16 %v1361, %v1361
        %v1367 = vunpack.c.l.b16 %v286
        %v1368 = vunpack.c.l.b16 %v287
        %v1369 = vunpack.c.l.b16 %v288
        %v1370 = vunpack.c.l.b16 %v289
        %v1371 = vpack.c.b16 %v1368, %v1367
        %v1372 = vpack.c.b16 %v1370, %v1369
        %v1376 = vsel %vm302, %v1362, 0
        %1378 = vmatprep.subr.bf16.mxu0 0
        %1379 = vmatpush1.bf16.msra.mxu0 %v1371
        %1380 = vmatprep.subr.bf16.mxu0 0
        %1381 = vmatpush1.bf16.msra.mxu0 %v1372
        %1382 = vmatprep.subr.bf16.mxu0 0
        %1383 = vmatpush1.bf16.msra.mxu0 0
        %1384 = vmatprep.subr.bf16.mxu0 0
        %1385 = vmatpush1.bf16.msra.mxu0 0
        %1386 = vmatprep.subr.bf16.mxu0 0
        %1387 = vmatpush1.bf16.msra.mxu0 0
        %1388 = vmatprep.subr.bf16.mxu0 0
        %1389 = vmatpush1.bf16.msra.mxu0 0
        %1390 = vmatprep.subr.bf16.mxu0 0
        %1391 = vmatpush1.bf16.msra.mxu0 0
        %1392 = vmatprep.subr.bf16.mxu0 0
        %1393 = vmatpush1.bf16.msra.mxu0 0
        %1394 = vmatprep.subr.bf16.mxu0 0
        %1395 = vmatpush1.bf16.msra.mxu0 0
        %1396 = vmatprep.subr.bf16.mxu0 0
        %1397 = vmatpush1.bf16.msra.mxu0 0
        %1398 = vmatprep.subr.bf16.mxu0 0
        %1399 = vmatpush1.bf16.msra.mxu0 0
        %1400 = vmatprep.subr.bf16.mxu0 0
        %1401 = vmatpush1.bf16.msra.mxu0 0
        %1402 = vmatprep.subr.bf16.mxu0 0
        %1403 = vmatpush1.bf16.msra.mxu0 0
        %1404 = vmatprep.subr.bf16.mxu0 0
        %1405 = vmatpush1.bf16.msra.mxu0 0
        %1406 = vmatprep.subr.bf16.mxu0 0
        %1407 = vmatpush1.bf16.msra.mxu0 0
        %1408 = vmatprep.subr.bf16.mxu0 0
        %1409 = vmatpush1.bf16.msra.mxu0 0
        %1410 = vmatprep.mubr.bf16.mxu0 0
        %1411 = vmatmul.mubr.bf16.gmra.mrb[0].mxu0 %v1376
        %v1412 = vpop.f32.mrb[0].mxu0
        %v1413 = vadd.f32 0.0, %v1412
        %v1414 = vpop.f32.mrb[0].mxu0
        %v1415 = vpop.f32.mrb[0].mxu0
        %v1416 = vpop.f32.mrb[0].mxu0
        %1417 = vdwg.mxu0
        %1418 = vst.msk [vmem:[%s278] sm:$0xff] %vm302, %v1413
        %s1419 = sand.u32 %s127, 1
        %s1420 = scalar_lea.sflag [#allocation4], %s1419
        %s1421 = sand.u32 %s127, 1
        %s1422 = smul.addr %s1421, 8
        %s1423 = scalar_lea.vmem [#allocation10], %s1422
        // Predicated region
        $region53: #{tpu_custom_call.1} parent=35 // pred_check
          %p1424 = pneg %p137
        $region54: #{tpu_custom_call.1} parent=35 // pred_check_branch
          %1426 = sbr.rel (%p1424) target = $region56
        $region55: #{tpu_custom_call.1} parent=35 // pred_region
          %s1428 = ssub.s32 128, 128
          %1429 = vsyncadd %s1420, %s1428
          %s1430 = smul.addr %s25, 128
          %s1431 = scalar_lea.hbm %s4, %s1430
          %s1433 = sshll.u32 %s1423, 4
          %s1434 = int_to_ptr.vmem [resolvable:$true] %s1433
          %1436 = dma.vmem_to_hbm [thread:$0]  %s1434, 128, %s1431, %s1420
        $region56: #{tpu_custom_call.1} parent=35 // pred_fallthru
          _
      $region36: #{tpu_custom_call.1} parent=5 // pred_fallthru
        _
      %p1437 = scmp.le.s32.totalorder 2, %s20
      // Predicated region
      $region57: #{tpu_custom_call.1} parent=5 // pred_check
        %p1438 = pneg %p1437
      $region58: #{tpu_custom_call.1} parent=5 // pred_check_branch
        %1440 = sbr.rel (%p1438) target = $region60
      $region59: #{tpu_custom_call.1} parent=5 // pred_region
        %s1441 = ssub.s32 %s20, 2
        // Predicated region
        $region61: #{tpu_custom_call.1} parent=59 // pred_check
          %p1442 = pneg %p143
        $region62: #{tpu_custom_call.1} parent=59 // pred_check_branch
          %1444 = sbr.rel (%p1442) target = $region64
        $region63: #{tpu_custom_call.1} parent=59 // pred_region
          %s1445 = sand.u32 %s128, 1
          %s1446 = scalar_lea.sflag [#allocation4], %s1445
          %s1447 = sand.u32 %s128, 1
          %s1448 = smul.addr %s1447, 8
          %s1449 = scalar_lea.vmem [#allocation10], %s1448
          %1450 = dma.done %s1446, 128
        $region64: #{tpu_custom_call.1} parent=59 // pred_fallthru
          _
      $region60: #{tpu_custom_call.1} parent=5 // pred_fallthru
        _
    $region6: #{tpu_custom_call.1} parent=1 // loop_footer
      %s24 = sadd.s32 1, %s20
    $region7: #{tpu_custom_call.1} parent=1 // loop_footer_branch
      %19 = sbr.rel target = $region3
    $region8: #{tpu_custom_call.1} parent=1 // loop_exit
      _
    %1451 = vsyncpa [#allocation3], 1
    %s1452 = scalar_lea.sflag [#allocation3], 1
    %1453 = vsyncpa %s1452, 1
    %1454 = vsyncpa [#allocation6], 1
    %s1455 = scalar_lea.sflag [#allocation6], 1
    %1456 = vsyncpa %s1455, 1
    %1457 = vsyncpa [#allocation9], 1
    %1458 = vsyncpa [#allocation4], 1
    %s1459 = scalar_lea.sflag [#allocation4], 1
    %1460 = vsyncpa %s1459, 1

</llo_original>
